<compile_context>
chip_gen: v7x
topology: tpu7x:2x2x1
jax: 0.10.0
libtpu: 0.0.40
codegen_flags: <defaults>
</compile_context>

<pallas_src>
import jax
import jax.numpy as jnp
from jax.experimental import pallas as pl
from jax.experimental.pallas import tpu as pltpu


# ----------------------------- Pallas kernel ------------------------------ #

def _make_fused_kernel(n_scales, c_tots):
    """Fused kernel for all pyramid scales.

    refs layout (inputs first, then outputs):
      [x_0, w_0, b_0, x_1, w_1, b_1, ..., x_{S-1}, w_{S-1}, b_{S-1},
       o_0, ..., o_{S-1}]
      x_s: (F*Cin_s, M_s)   frames stacked along channels (frame 0 first)
      w_s: (C_tot_s, F*Cin_s) block-diagonal weights, BN scale folded in
      b_s: (C_tot_s, 1)     packed folded-BN biases
      o_s: (C_tot_s, M_s)

    Computes per scale:  o = SiLU(w @ x + b) + x[:C_tot]   (frame-0 residual).
    """
    def kernel(*refs):
        in_refs = refs[:3 * n_scales]
        out_refs = refs[3 * n_scales:]
        for s in range(n_scales):
            x = in_refs[3 * s][...]        # (F*Cin, M)
            w = in_refs[3 * s + 1][...]    # (C_tot, F*Cin)
            b = in_refs[3 * s + 2][...]    # (C_tot, 1)
            y = jnp.dot(w, x, preferred_element_type=jnp.float32) + b
            y = y * (1.0 / (1.0 + jnp.exp(-y)))   # SiLU (exact; exp on EUP)
            out_refs[s][...] = (y + x[:c_tots[s], :]).astype(out_refs[s].dtype)
    return kernel


def fused_dfp_call(xs, ws, bs):
    """xs[s]: (F*Cin_s, M_s); ws[s]: (C_tot_s, F*Cin_s); bs[s]: (C_tot_s, 1).

    One pallas_call processes every pyramid scale.
    """
    n_scales = len(xs)
    c_tots = tuple(int(w.shape[0]) for w in ws)

    # Crude VMEM sanity check for the fully-resident fused path.
    total_bytes = 0
    for s in range(n_scales):
        total_bytes += 4 * (xs[s].size + ws[s].size + bs[s].size
                            + c_tots[s] * xs[s].shape[1])
    assert total_bytes < 16 * 1024 * 1024, (
        "fused single-call path assumes all operands fit in VMEM; "
        "tile the M axis for larger inputs")

    in_specs, args = [], []
    for s in range(n_scales):
        for a in (xs[s], ws[s], bs[s]):
            in_specs.append(pl.BlockSpec(a.shape, lambda i: (0, 0)))
            args.append(a)
    out_specs = [pl.BlockSpec((c_tots[s], xs[s].shape[1]), lambda i: (0, 0))
                 for s in range(n_scales)]
    out_shape = tuple(
        jax.ShapeDtypeStruct((c_tots[s], xs[s].shape[1]), xs[s].dtype)
        for s in range(n_scales))

    return pl.pallas_call(
        _make_fused_kernel(n_scales, c_tots),
        out_shape=out_shape,
        grid_spec=pltpu.PrefetchScalarGridSpec(
            num_scalar_prefetch=0,
            grid=(1,),
            in_specs=in_specs,
            out_specs=out_specs,
        ),
        compiler_params=pltpu.CompilerParams(
            dimension_semantics=("arbitrary",)),
    )(*args)


# --------------------------- Module (glue in JAX) -------------------------- #

class DFPPAFPNLONGCPPallas:
    """JAX/Pallas port of DFPPAFPNLONGCP (off_pipe forward path only).

    Parameters are generated deterministically in __init__ (synthetic).
    BatchNorm is applied in eval mode and folded into the conv weights/biases.
    """

    def __init__(self,
                 width=0.5,
                 in_channels=(16, 32, 64),
                 frame_num=2,
                 with_short_cut=True,
                 merge_form='pure_concat',
                 out_channels=(((4, 8, 16), 1), ((4, 8, 16), 1)),
                 key=None):
        assert frame_num == sum(x[1] for x in out_channels)
        assert merge_form == 'pure_concat' and with_short_cut
        self.frame_num = frame_num
        self.out_channels = out_channels
        self.cin = [int(c * width) for c in in_channels]  # conv in-chans / scale

        if key is None:
            key = jax.random.PRNGKey(0)

        eps = 1e-3  # BatchNorm2d default eps in YOLOX BaseConv
        # params[group][scale] = (w (Cin,Cout), bn_scale (Cout,), bn_bias (Cout,))
        self.params = []
        for gi, (couts, _) in enumerate(out_channels):
            per_scale = []
            for sc in range(3):  # 0->jian2 (dark3), 1->jian1, 2->jian0
                cin = self.cin[sc]
                cout = couts[sc]
                key, k1, k2, k3, k4, k5 = jax.random.split(key, 6)
                w = jax.random.normal(k1, (cin, cout), jnp.float32) * 0.05
                gamma = 1.0 + 0.1 * jax.random.normal(k2, (cout,), jnp.float32)
                beta = 0.1 * jax.random.normal(k3, (cout,), jnp.float32)
                run_mean = 0.1 * jax.random.normal(k4, (cout,), jnp.float32)
                run_var = jnp.abs(1.0 + 0.1 * jax.random.normal(k5, (cout,), jnp.float32))
                bn_scale = gamma / jnp.sqrt(run_var + eps)
                bn_bias = beta - run_mean * bn_scale
                per_scale.append((w, bn_scale, bn_bias))
            self.params.append(per_scale)

        # frame_id -> group_id  (groups consume out_channels[i][1] frames each)
        self.frame_to_group = []
        for gi, (_, gfn) in enumerate(out_channels):
            self.frame_to_group.extend([gi] * gfn)

        # Precompute per-scale fused operands:
        #   wT[sc]:  (C_tot, F*Cin) block-diagonal, BN scale folded in
        #   bcat[sc]: (C_tot, 1)    packed folded-BN biases
        self.wT, self.bcat = [], []
        for sc in range(3):
            cin = self.cin[sc]
            couts = [self.out_channels[self.frame_to_group[f]][0][sc]
                     for f in range(self.frame_num)]
            c_tot = sum(couts)
            assert c_tot == cin, "pure_concat + shortcut requires sum(Cout) == Cin"
            wt = jnp.zeros((c_tot, self.frame_num * cin), jnp.float32)
            bvec = []
            off = 0
            for f in range(self.frame_num):
                g = self.frame_to_group[f]
                w, s, b = self.params[g][sc]
                w_folded = (w * s[None, :]).T          # (cout, cin)
                wt = wt.at[off:off + couts[f], f * cin:(f + 1) * cin].set(w_folded)
                bvec.append(b)
                off += couts[f]
            self.wT.append(wt)
            self.bcat.append(jnp.concatenate(bvec).reshape(c_tot, 1))

    def __call__(self, inputs):
        """inputs: list of frame tuples [(p2, p1, p0), ...] in NCHW float32."""
        n_scales = 3
        xs, shapes = [], []
        for sc in range(n_scales):
            N, C, H, W = inputs[0][sc].shape
            shapes.append((N, C, H, W))
            # NCHW -> (C, N*H*W) via leading-dim transpose only, stack frames on channels.
            stacked = jnp.concatenate(
                [jnp.transpose(inputs[f][sc], (1, 0, 2, 3)).reshape(C, N * H * W)
                 for f in range(self.frame_num)], axis=0)   # (F*C, N*H*W)
            xs.append(stacked)

        outs = fused_dfp_call(xs, self.wT, self.bcat)

        results = []
        for sc in range(n_scales):
            N, C, H, W = shapes[sc]
            o = jnp.transpose(outs[sc].reshape(C, N, H, W), (1, 0, 2, 3))  # back to NCHW
            results.append(o)
        return tuple(results)

    # Pure-JAX reference (no Pallas) for verification.
    def reference(self, inputs):
        outputs = []
        for sc in range(3):
            pieces = []
            for f in range(self.frame_num):
                g = self.frame_to_group[f]
                w, s, b = self.params[g][sc]
                x = inputs[f][sc]  # NCHW
                y = jnp.einsum('nchw,cd->ndhw', x, w)
                y = y * s[None, :, None, None] + b[None, :, None, None]
                y = y * jax.nn.sigmoid(y)
                pieces.append(y)
            out = jnp.concatenate(pieces, axis=1) + inputs[0][sc]
            outputs.append(out)
        return tuple(outputs)


# --------------------------------- main ------------------------------------ #

if __name__ == "__main__":
    key = jax.random.PRNGKey(0)
    model = DFPPAFPNLONGCPPallas(key=jax.random.PRNGKey(42))

    N = 2
    # pyramid spatial sizes / channels (post-width scaling): 8@16x16, 16@8x8, 32@4x4
    shapes = [(N, 8, 16, 16), (N, 16, 8, 8), (N, 32, 4, 4)]
    inputs = []
    for f in range(model.frame_num):
        frame = []
        for sh in shapes:
            key, k = jax.random.split(key)
            frame.append(jax.random.normal(k, sh, jnp.float32))
        inputs.append(tuple(frame))

    out = model(inputs)
    out = jax.block_until_ready(out)

    ref = model.reference(inputs)
    ref = jax.block_until_ready(ref)

    ok = True
    for o, r in zip(out, ref):
        if o.shape != r.shape:
            ok = False
        if not jnp.allclose(o, r, atol=1e-4, rtol=1e-4):
            ok = False

    if ok:
        print("KERNEL_OK")
    else:
        print("MISMATCH")
</pallas_src>

<mosaic_0001>
module attributes {stable_mosaic.version = 11 : i64} {
  func.func @kernel(%arg0: i32, %arg1: memref<16x512xf32, #tpu.memory_space<vmem>>, %arg2: memref<8x16xf32, #tpu.memory_space<vmem>>, %arg3: memref<8x1xf32, #tpu.memory_space<vmem>>, %arg4: memref<32x128xf32, #tpu.memory_space<vmem>>, %arg5: memref<16x32xf32, #tpu.memory_space<vmem>>, %arg6: memref<16x1xf32, #tpu.memory_space<vmem>>, %arg7: memref<64x32xf32, #tpu.memory_space<vmem>>, %arg8: memref<32x64xf32, #tpu.memory_space<vmem>>, %arg9: memref<32x1xf32, #tpu.memory_space<vmem>>, %arg10: memref<8x512xf32, #tpu.memory_space<vmem>>, %arg11: memref<16x128xf32, #tpu.memory_space<vmem>>, %arg12: memref<32x32xf32, #tpu.memory_space<vmem>>) attributes {dimension_semantics = [#tpu.dimension_semantics<arbitrary>], iteration_bounds = array<i64: 1>, scalar_prefetch = 0 : i64, scratch_operands = 0 : i64, tpu.core_type = #tpu.core_type<tc>, window_params = [{pipeline_mode = #tpu.pipeline_mode<synchronous>, transform_indices = @transform_0, window_bounds = array<i64: 16, 512>}, {pipeline_mode = #tpu.pipeline_mode<synchronous>, transform_indices = @transform_1, window_bounds = array<i64: 8, 16>}, {pipeline_mode = #tpu.pipeline_mode<synchronous>, transform_indices = @transform_2, window_bounds = array<i64: 8, 1>}, {pipeline_mode = #tpu.pipeline_mode<synchronous>, transform_indices = @transform_3, window_bounds = array<i64: 32, 128>}, {pipeline_mode = #tpu.pipeline_mode<synchronous>, transform_indices = @transform_4, window_bounds = array<i64: 16, 32>}, {pipeline_mode = #tpu.pipeline_mode<synchronous>, transform_indices = @transform_5, window_bounds = array<i64: 16, 1>}, {pipeline_mode = #tpu.pipeline_mode<synchronous>, transform_indices = @transform_6, window_bounds = array<i64: 64, 32>}, {pipeline_mode = #tpu.pipeline_mode<synchronous>, transform_indices = @transform_7, window_bounds = array<i64: 32, 64>}, {pipeline_mode = #tpu.pipeline_mode<synchronous>, transform_indices = @transform_8, window_bounds = array<i64: 32, 1>}, {pipeline_mode = #tpu.pipeline_mode<synchronous>, transform_indices = @transform_9, window_bounds = array<i64: 8, 512>}, {pipeline_mode = #tpu.pipeline_mode<synchronous>, transform_indices = @transform_10, window_bounds = array<i64: 16, 128>}, {pipeline_mode = #tpu.pipeline_mode<synchronous>, transform_indices = @transform_11, window_bounds = array<i64: 32, 32>}]} {
    %c0 = arith.constant 0 : index
    %c0_0 = arith.constant 0 : index
    %0 = vector.load %arg1[%c0, %c0_0] : memref<16x512xf32, #tpu.memory_space<vmem>>, vector<16x512xf32>
    %c0_1 = arith.constant 0 : index
    %c0_2 = arith.constant 0 : index
    %1 = vector.load %arg2[%c0_1, %c0_2] : memref<8x16xf32, #tpu.memory_space<vmem>>, vector<8x16xf32>
    %c0_3 = arith.constant 0 : index
    %c0_4 = arith.constant 0 : index
    %2 = vector.load %arg3[%c0_3, %c0_4] : memref<8x1xf32, #tpu.memory_space<vmem>>, vector<8x1xf32>
    %cst = arith.constant dense<0.000000e+00> : vector<8x512xf32>
    %3 = tpu.matmul %1, %0, %cst {dimension_numbers = #tpu.dot_dimension_numbers<[1], [0], [0], [1], [0, 0, 1, 1], [], []>} : vector<8x16xf32>, vector<16x512xf32>, vector<8x512xf32> -> vector<8x512xf32>
    %4 = vector.broadcast %2 : vector<8x1xf32> to vector<8x512xf32>
    %5 = arith.addf %3, %4 : vector<8x512xf32>
    %cst_5 = arith.constant 0.000000e+00 : f32
    %6 = vector.broadcast %cst_5 : f32 to vector<8x512xf32>
    %7 = arith.subf %6, %5 : vector<8x512xf32>
    %8 = math.exp %7 : vector<8x512xf32>
    %cst_6 = arith.constant 1.000000e+00 : f32
    %9 = vector.broadcast %cst_6 : f32 to vector<8x512xf32>
    %10 = arith.addf %9, %8 : vector<8x512xf32>
    %cst_7 = arith.constant 1.000000e+00 : f32
    %11 = vector.broadcast %cst_7 : f32 to vector<8x512xf32>
    %12 = arith.divf %11, %10 : vector<8x512xf32>
    %13 = arith.mulf %5, %12 : vector<8x512xf32>
    %14 = vector.extract_strided_slice %0 {offsets = [0, 0], sizes = [8, 512], strides = [1, 1]} : vector<16x512xf32> to vector<8x512xf32>
    %15 = arith.addf %13, %14 : vector<8x512xf32>
    %c0_8 = arith.constant 0 : index
    %c0_9 = arith.constant 0 : index
    %16 = vector.load %arg10[%c0_8, %c0_9] : memref<8x512xf32, #tpu.memory_space<vmem>>, vector<8x512xf32>
    tpu.vector_store %arg10[%c0_8, %c0_9], %15 {strides = array<i32>} : memref<8x512xf32, #tpu.memory_space<vmem>>, vector<8x512xf32>,
    %c0_10 = arith.constant 0 : index
    %c0_11 = arith.constant 0 : index
    %17 = vector.load %arg4[%c0_10, %c0_11] : memref<32x128xf32, #tpu.memory_space<vmem>>, vector<32x128xf32>
    %c0_12 = arith.constant 0 : index
    %c0_13 = arith.constant 0 : index
    %18 = vector.load %arg5[%c0_12, %c0_13] : memref<16x32xf32, #tpu.memory_space<vmem>>, vector<16x32xf32>
    %c0_14 = arith.constant 0 : index
    %c0_15 = arith.constant 0 : index
    %19 = vector.load %arg6[%c0_14, %c0_15] : memref<16x1xf32, #tpu.memory_space<vmem>>, vector<16x1xf32>
    %cst_16 = arith.constant dense<0.000000e+00> : vector<16x128xf32>
    %20 = tpu.matmul %18, %17, %cst_16 {dimension_numbers = #tpu.dot_dimension_numbers<[1], [0], [0], [1], [0, 0, 1, 1], [], []>} : vector<16x32xf32>, vector<32x128xf32>, vector<16x128xf32> -> vector<16x128xf32>
    %21 = vector.broadcast %19 : vector<16x1xf32> to vector<16x128xf32>
    %22 = arith.addf %20, %21 : vector<16x128xf32>
    %cst_17 = arith.constant 0.000000e+00 : f32
    %23 = vector.broadcast %cst_17 : f32 to vector<16x128xf32>
    %24 = arith.subf %23, %22 : vector<16x128xf32>
    %25 = math.exp %24 : vector<16x128xf32>
    %cst_18 = arith.constant 1.000000e+00 : f32
    %26 = vector.broadcast %cst_18 : f32 to vector<16x128xf32>
    %27 = arith.addf %26, %25 : vector<16x128xf32>
    %cst_19 = arith.constant 1.000000e+00 : f32
    %28 = vector.broadcast %cst_19 : f32 to vector<16x128xf32>
    %29 = arith.divf %28, %27 : vector<16x128xf32>
    %30 = arith.mulf %22, %29 : vector<16x128xf32>
    %31 = vector.extract_strided_slice %17 {offsets = [0, 0], sizes = [16, 128], strides = [1, 1]} : vector<32x128xf32> to vector<16x128xf32>
    %32 = arith.addf %30, %31 : vector<16x128xf32>
    %c0_20 = arith.constant 0 : index
    %c0_21 = arith.constant 0 : index
    %33 = vector.load %arg11[%c0_20, %c0_21] : memref<16x128xf32, #tpu.memory_space<vmem>>, vector<16x128xf32>
    tpu.vector_store %arg11[%c0_20, %c0_21], %32 {strides = array<i32>} : memref<16x128xf32, #tpu.memory_space<vmem>>, vector<16x128xf32>,
    %c0_22 = arith.constant 0 : index
    %c0_23 = arith.constant 0 : index
    %34 = vector.load %arg7[%c0_22, %c0_23] : memref<64x32xf32, #tpu.memory_space<vmem>>, vector<64x32xf32>
    %c0_24 = arith.constant 0 : index
    %c0_25 = arith.constant 0 : index
    %35 = vector.load %arg8[%c0_24, %c0_25] : memref<32x64xf32, #tpu.memory_space<vmem>>, vector<32x64xf32>
    %c0_26 = arith.constant 0 : index
    %c0_27 = arith.constant 0 : index
    %36 = vector.load %arg9[%c0_26, %c0_27] : memref<32x1xf32, #tpu.memory_space<vmem>>, vector<32x1xf32>
    %cst_28 = arith.constant dense<0.000000e+00> : vector<32x32xf32>
    %37 = tpu.matmul %35, %34, %cst_28 {dimension_numbers = #tpu.dot_dimension_numbers<[1], [0], [0], [1], [0, 0, 1, 1], [], []>} : vector<32x64xf32>, vector<64x32xf32>, vector<32x32xf32> -> vector<32x32xf32>
    %38 = vector.broadcast %36 : vector<32x1xf32> to vector<32x32xf32>
    %39 = arith.addf %37, %38 : vector<32x32xf32>
    %cst_29 = arith.constant 0.000000e+00 : f32
    %40 = vector.broadcast %cst_29 : f32 to vector<32x32xf32>
    %41 = arith.subf %40, %39 : vector<32x32xf32>
    %42 = math.exp %41 : vector<32x32xf32>
    %cst_30 = arith.constant 1.000000e+00 : f32
    %43 = vector.broadcast %cst_30 : f32 to vector<32x32xf32>
    %44 = arith.addf %43, %42 : vector<32x32xf32>
    %cst_31 = arith.constant 1.000000e+00 : f32
    %45 = vector.broadcast %cst_31 : f32 to vector<32x32xf32>
    %46 = arith.divf %45, %44 : vector<32x32xf32>
    %47 = arith.mulf %39, %46 : vector<32x32xf32>
    %48 = vector.extract_strided_slice %34 {offsets = [0, 0], sizes = [32, 32], strides = [1, 1]} : vector<64x32xf32> to vector<32x32xf32>
    %49 = arith.addf %47, %48 : vector<32x32xf32>
    %c0_32 = arith.constant 0 : index
    %c0_33 = arith.constant 0 : index
    %50 = vector.load %arg12[%c0_32, %c0_33] : memref<32x32xf32, #tpu.memory_space<vmem>>, vector<32x32xf32>
    tpu.vector_store %arg12[%c0_32, %c0_33], %49 {strides = array<i32>} : memref<32x32xf32, #tpu.memory_space<vmem>>, vector<32x32xf32>,
    return
  }
  func.func @transform_0(%arg0: i32) -> (i32, i32) {
    %c0_i32 = arith.constant 0 : i32
    %c0_i32_0 = arith.constant 0 : i32
    %c0_i32_1 = arith.constant 0 : i32
    return %c0_i32, %c0_i32_0 : i32, i32
  }
  func.func @transform_1(%arg0: i32) -> (i32, i32) {
    %c0_i32 = arith.constant 0 : i32
    %c0_i32_0 = arith.constant 0 : i32
    %c0_i32_1 = arith.constant 0 : i32
    return %c0_i32, %c0_i32_0 : i32, i32
  }
  func.func @transform_2(%arg0: i32) -> (i32, i32) {
    %c0_i32 = arith.constant 0 : i32
    %c0_i32_0 = arith.constant 0 : i32
    %c0_i32_1 = arith.constant 0 : i32
    return %c0_i32, %c0_i32_0 : i32, i32
  }
  func.func @transform_3(%arg0: i32) -> (i32, i32) {
    %c0_i32 = arith.constant 0 : i32
    %c0_i32_0 = arith.constant 0 : i32
    %c0_i32_1 = arith.constant 0 : i32
    return %c0_i32, %c0_i32_0 : i32, i32
  }
  func.func @transform_4(%arg0: i32) -> (i32, i32) {
    %c0_i32 = arith.constant 0 : i32
    %c0_i32_0 = arith.constant 0 : i32
    %c0_i32_1 = arith.constant 0 : i32
    return %c0_i32, %c0_i32_0 : i32, i32
  }
  func.func @transform_5(%arg0: i32) -> (i32, i32) {
    %c0_i32 = arith.constant 0 : i32
    %c0_i32_0 = arith.constant 0 : i32
    %c0_i32_1 = arith.constant 0 : i32
    return %c0_i32, %c0_i32_0 : i32, i32
  }
  func.func @transform_6(%arg0: i32) -> (i32, i32) {
    %c0_i32 = arith.constant 0 : i32
    %c0_i32_0 = arith.constant 0 : i32
    %c0_i32_1 = arith.constant 0 : i32
    return %c0_i32, %c0_i32_0 : i32, i32
  }
  func.func @transform_7(%arg0: i32) -> (i32, i32) {
    %c0_i32 = arith.constant 0 : i32
    %c0_i32_0 = arith.constant 0 : i32
    %c0_i32_1 = arith.constant 0 : i32
    return %c0_i32, %c0_i32_0 : i32, i32
  }
  func.func @transform_8(%arg0: i32) -> (i32, i32) {
    %c0_i32 = arith.constant 0 : i32
    %c0_i32_0 = arith.constant 0 : i32
    %c0_i32_1 = arith.constant 0 : i32
    return %c0_i32, %c0_i32_0 : i32, i32
  }
  func.func @transform_9(%arg0: i32) -> (i32, i32) {
    %c0_i32 = arith.constant 0 : i32
    %c0_i32_0 = arith.constant 0 : i32
    %c0_i32_1 = arith.constant 0 : i32
    return %c0_i32, %c0_i32_0 : i32, i32
  }
  func.func @transform_10(%arg0: i32) -> (i32, i32) {
    %c0_i32 = arith.constant 0 : i32
    %c0_i32_0 = arith.constant 0 : i32
    %c0_i32_1 = arith.constant 0 : i32
    return %c0_i32, %c0_i32_0 : i32, i32
  }
  func.func @transform_11(%arg0: i32) -> (i32, i32) {
    %c0_i32 = arith.constant 0 : i32
    %c0_i32_0 = arith.constant 0 : i32
    %c0_i32_1 = arith.constant 0 : i32
    return %c0_i32, %c0_i32_0 : i32, i32
  }
}

</mosaic_0001>

<llo_original>
// kernel: tpu_custom_call.1
$region0: #{tpu_custom_call.1}
  #allocation0 [shape = 'u32[]', space=smem, size = 0x4, offset = 0x4, fixed_abs, tag = 'smem constant byte address 0x4 - core index']
  #allocation1 [shape = 'u32[144,128]{1,0:T(1,128)}', space=vmem, size = 0x12000, scoped, tag = 'internal scratch']
  %s0 = inlined_call_operand.vmem [shape: f32[16,512], index: 0, kind: input, shape index: {}]
  %s1 = inlined_call_operand.hbm [shape: f32[8,16], index: 1, kind: input, shape index: {}]
  %s2 = inlined_call_operand.vmem [shape: f32[8,1], index: 2, kind: input, shape index: {}]
  %s3 = inlined_call_operand.vmem [shape: f32[32,128], index: 3, kind: input, shape index: {}]
  %s4 = inlined_call_operand.hbm [shape: f32[16,32], index: 4, kind: input, shape index: {}]
  %s5 = inlined_call_operand.vmem [shape: f32[16,1], index: 5, kind: input, shape index: {}]
  %s6 = inlined_call_operand.vmem [shape: f32[64,32], index: 6, kind: input, shape index: {}]
  %s7 = inlined_call_operand.vmem [shape: f32[32,64], index: 7, kind: input, shape index: {}]
  %s8 = inlined_call_operand.vmem [shape: f32[32,1], index: 8, kind: input, shape index: {}]
  %s9 = inlined_call_operand.hbm [shape: f32[8,512], index: 9, kind: output, shape index: {0}]
  %s10 = inlined_call_operand.hbm [shape: f32[16,128], index: 10, kind: output, shape index: {1}]
  %s11 = inlined_call_operand.hbm [shape: f32[32,32], index: 11, kind: output, shape index: {2}]
  %12 = xla_tuple %s9, %s10, %s11
  %s13 = sld [smem:[#allocation0]]
  $region70: #{tpu_custom_call.1} parent=0
    _
  %s15 = ssub.s32 1, %s13
  %s16 = scalar_select 0, %s15, %s13
  $region1: #{tpu_custom_call.1} parent=0
    #allocation2 [shape = 'u8[4096]{0}', space=vmem, size = 0x1000, scoped, tag = 'input window, operand 1, single buffered']
    #allocation3 [shape = 's32[1]{0}', space=sflag, size = 0x4, scoped, tag = 'scoped memory for tpu_custom_call.1']
    #allocation4 [shape = 's32[1]{0}', space=sflag, size = 0x4, scoped, tag = 'scoped memory for tpu_custom_call.1']
    #allocation5 [shape = 'u8[8192]{0}', space=vmem, size = 0x2000, scoped, tag = 'input window, operand 4, single buffered']
    #allocation6 [shape = 's32[1]{0}', space=sflag, size = 0x4, scoped, tag = 'scoped memory for tpu_custom_call.1']
    #allocation7 [shape = 'u8[16384]{0}', space=vmem, size = 0x4000, scoped, tag = 'output window, operand 0, single buffered']
    #allocation8 [shape = 'u8[8192]{0}', space=vmem, size = 0x2000, scoped, tag = 'output window, operand 1, single buffered']
    #allocation9 [shape = 's32[1]{0}', space=sflag, size = 0x4, scoped, tag = 'scoped memory for tpu_custom_call.1']
    #allocation10 [shape = 'u8[16384]{0}', space=vmem, size = 0x4000, scoped, tag = 'output window, operand 2, single buffered']
    %17 = vsyncpa [#allocation3], 0
    %18 = vsyncpa [#allocation6], 0
    %19 = vsyncpa [#allocation4], 0
    %20 = vsyncpa [#allocation9], 0
    // Predicated region
    $region2: #{tpu_custom_call.1} parent=1 // pred_check
      _
    $region3: #{tpu_custom_call.1} parent=1 // pred_check_branch
      %22 = sbr.rel (0) target = $region5
    $region4: #{tpu_custom_call.1} parent=1 // pred_region
      _
    $region5: #{tpu_custom_call.1} parent=1 // pred_fallthru
      _
    // Predicated region
    $region6: #{tpu_custom_call.1} parent=1 // pred_check
      _
    $region7: #{tpu_custom_call.1} parent=1 // pred_check_branch
      %24 = sbr.rel (0) target = $region9
    $region8: #{tpu_custom_call.1} parent=1 // pred_region
      %s26 = ssub.s32 128, 128
      %27 = vsyncadd [#allocation3], %s26
      %s29 = sshll.u32 [#allocation2], 4
      %s30 = int_to_ptr.vmem [resolvable:$true] %s29
      %32 = dma.hbm_to_vmem [thread:$0]  %s1, 128, %s30, [#allocation3]
    $region9: #{tpu_custom_call.1} parent=1 // pred_fallthru
      _
    // Predicated region
    $region10: #{tpu_custom_call.1} parent=1 // pred_check
      _
    $region11: #{tpu_custom_call.1} parent=1 // pred_check_branch
      %34 = sbr.rel (0) target = $region13
    $region12: #{tpu_custom_call.1} parent=1 // pred_region
      _
    $region13: #{tpu_custom_call.1} parent=1 // pred_fallthru
      _
    // Predicated region
    $region14: #{tpu_custom_call.1} parent=1 // pred_check
      _
    $region15: #{tpu_custom_call.1} parent=1 // pred_check_branch
      %36 = sbr.rel (0) target = $region17
    $region16: #{tpu_custom_call.1} parent=1 // pred_region
      _
    $region17: #{tpu_custom_call.1} parent=1 // pred_fallthru
      _
    // Predicated region
    $region18: #{tpu_custom_call.1} parent=1 // pred_check
      _
    $region19: #{tpu_custom_call.1} parent=1 // pred_check_branch
      %38 = sbr.rel (0) target = $region21
    $region20: #{tpu_custom_call.1} parent=1 // pred_region
      %s40 = ssub.s32 256, 256
      %41 = vsyncadd [#allocation6], %s40
      %s42 = sshll.u32 [#allocation5], 4
      %s43 = int_to_ptr.vmem [resolvable:$true] %s42
      %48 = dma.hbm_to_vmem [thread:$0]  %s4, 256, %s43, [#allocation6], 128, 128, 8
    $region21: #{tpu_custom_call.1} parent=1 // pred_fallthru
      _
    // Predicated region
    $region22: #{tpu_custom_call.1} parent=1 // pred_check
      _
    $region23: #{tpu_custom_call.1} parent=1 // pred_check_branch
      %50 = sbr.rel (0) target = $region25
    $region24: #{tpu_custom_call.1} parent=1 // pred_region
      _
    $region25: #{tpu_custom_call.1} parent=1 // pred_fallthru
      _
    // Predicated region
    $region26: #{tpu_custom_call.1} parent=1 // pred_check
      _
    $region27: #{tpu_custom_call.1} parent=1 // pred_check_branch
      %52 = sbr.rel (0) target = $region29
    $region28: #{tpu_custom_call.1} parent=1 // pred_region
      _
    $region29: #{tpu_custom_call.1} parent=1 // pred_fallthru
      _
    // Predicated region
    $region30: #{tpu_custom_call.1} parent=1 // pred_check
      _
    $region31: #{tpu_custom_call.1} parent=1 // pred_check_branch
      %54 = sbr.rel (0) target = $region33
    $region32: #{tpu_custom_call.1} parent=1 // pred_region
      _
    $region33: #{tpu_custom_call.1} parent=1 // pred_fallthru
      _
    // Predicated region
    $region34: #{tpu_custom_call.1} parent=1 // pred_check
      _
    $region35: #{tpu_custom_call.1} parent=1 // pred_check_branch
      %56 = sbr.rel (0) target = $region37
    $region36: #{tpu_custom_call.1} parent=1 // pred_region
      _
    $region37: #{tpu_custom_call.1} parent=1 // pred_fallthru
      _
    // Predicated region
    $region38: #{tpu_custom_call.1} parent=1 // pred_check
      _
    $region39: #{tpu_custom_call.1} parent=1 // pred_check_branch
      %58 = sbr.rel (0) target = $region41
    $region40: #{tpu_custom_call.1} parent=1 // pred_region
      %59 = dma.done [#allocation3], 128
    $region41: #{tpu_custom_call.1} parent=1 // pred_fallthru
      _
    // Predicated region
    $region42: #{tpu_custom_call.1} parent=1 // pred_check
      _
    $region43: #{tpu_custom_call.1} parent=1 // pred_check_branch
      %61 = sbr.rel (0) target = $region45
    $region44: #{tpu_custom_call.1} parent=1 // pred_region
      %62 = dma.done [#allocation6], 256
    $region45: #{tpu_custom_call.1} parent=1 // pred_fallthru
      _
    %v63 = vld [vmem:[%s0] sm:$0xff]
    %v64 = vld [vmem:[%s0 + $0x8] sm:$0xff]
    %v65 = vld [vmem:[%s0 + $0x10] sm:$0xff]
    %v66 = vld [vmem:[%s0 + $0x18] sm:$0xff]
    %v67 = vld [vmem:[%s0 + $0x20] sm:$0xff]
    %v68 = vld [vmem:[%s0 + $0x28] sm:$0xff]
    %v69 = vld [vmem:[%s0 + $0x30] sm:$0xff]
    %v70 = vld [vmem:[%s0 + $0x38] sm:$0xff]
    %v71 = vld [vmem:[#allocation2] sm:$0xff]
    %v72 = vld [vmem:[%s2] sm:$0xff]
    %74 = vset.pattern.permute.xlu0 0
    %75 = vperm.xlu0 %74, %v72
    %v76 = vpop.permute.xlu0 %75
    %vm78 = vcmask 130048
    %v80 = vsel %vm78, %v71, 0
    %82 = vmatprep.subr.mxu0 %v64
    %83 = vmatpush1.msra.mxu0 %v63
    %84 = vmatprep.subr.mxu0 %v68
    %85 = vmatpush1.msra.mxu0 %v67
    %86 = vmatprep.subr.mxu0 0.0
    %87 = vmatpush1.msra.mxu0 0.0
    %88 = vmatprep.subr.mxu0 0.0
    %89 = vmatpush1.msra.mxu0 0.0
    %90 = vmatprep.subr.mxu0 0.0
    %91 = vmatpush1.msra.mxu0 0.0
    %92 = vmatprep.subr.mxu0 0.0
    %93 = vmatpush1.msra.mxu0 0.0
    %94 = vmatprep.subr.mxu0 0.0
    %95 = vmatpush1.msra.mxu0 0.0
    %96 = vmatprep.subr.mxu0 0.0
    %97 = vmatpush1.msra.mxu0 0.0
    %98 = vmatprep.subr.mxu0 0.0
    %99 = vmatpush1.msra.mxu0 0.0
    %100 = vmatprep.subr.mxu0 0.0
    %101 = vmatpush1.msra.mxu0 0.0
    %102 = vmatprep.subr.mxu0 0.0
    %103 = vmatpush1.msra.mxu0 0.0
    %104 = vmatprep.subr.mxu0 0.0
    %105 = vmatpush1.msra.mxu0 0.0
    %106 = vmatprep.subr.mxu0 0.0
    %107 = vmatpush1.msra.mxu0 0.0
    %108 = vmatprep.subr.mxu0 0.0
    %109 = vmatpush1.msra.mxu0 0.0
    %110 = vmatprep.subr.mxu0 0.0
    %111 = vmatpush1.msra.mxu0 0.0
    %112 = vmatprep.subr.mxu0 0.0
    %113 = vmatpush1.msra.mxu0 0.0
    %114 = vmatprep.subr.mxu0 0.0
    %115 = vmatpush1.msra.mxu0 0.0
    %116 = vmatprep.subr.mxu0 0.0
    %117 = vmatpush1.msra.mxu0 0.0
    %118 = vmatprep.subr.mxu0 0.0
    %119 = vmatpush1.msra.mxu0 0.0
    %120 = vmatprep.subr.mxu0 0.0
    %121 = vmatpush1.msra.mxu0 0.0
    %122 = vmatprep.subr.mxu0 0.0
    %123 = vmatpush1.msra.mxu0 0.0
    %124 = vmatprep.subr.mxu0 0.0
    %125 = vmatpush1.msra.mxu0 0.0
    %126 = vmatprep.subr.mxu0 0.0
    %127 = vmatpush1.msra.mxu0 0.0
    %128 = vmatprep.subr.mxu0 0.0
    %129 = vmatpush1.msra.mxu0 0.0
    %130 = vmatprep.subr.mxu0 0.0
    %131 = vmatpush1.msra.mxu0 0.0
    %132 = vmatprep.subr.mxu0 0.0
    %133 = vmatpush1.msra.mxu0 0.0
    %134 = vmatprep.subr.mxu0 0.0
    %135 = vmatpush1.msra.mxu0 0.0
    %136 = vmatprep.subr.mxu0 0.0
    %137 = vmatpush1.msra.mxu0 0.0
    %138 = vmatprep.subr.mxu0 0.0
    %139 = vmatpush1.msra.mxu0 0.0
    %140 = vmatprep.subr.mxu0 0.0
    %141 = vmatpush1.msra.mxu0 0.0
    %142 = vmatprep.subr.mxu0 0.0
    %143 = vmatpush1.msra.mxu0 0.0
    %144 = vmatprep.subr.mxu0 0.0
    %145 = vmatpush1.msra.mxu0 0.0
    %146 = vmatprep.mubr.f32.mxu0 0.0
    %147 = vmatmul.mubr.f32.gmra.mrb[0].mxu0 %v80
    %v148 = vpop.f32.mrb[0].mxu0
    %v149 = vadd.f32 %v76, %v148
    %v150 = vpop.f32.mrb[0].mxu0
    %v151 = vadd.f32 %v76, %v150
    %152 = vdwg.mxu0
    %153 = vmatprep.subr.mxu0 %v66
    %154 = vmatpush1.msra.mxu0 %v65
    %155 = vmatprep.subr.mxu0 %v70
    %156 = vmatpush1.msra.mxu0 %v69
    %157 = vmatprep.subr.mxu0 0.0
    %158 = vmatpush1.msra.mxu0 0.0
    %159 = vmatprep.subr.mxu0 0.0
    %160 = vmatpush1.msra.mxu0 0.0
    %161 = vmatprep.subr.mxu0 0.0
    %162 = vmatpush1.msra.mxu0 0.0
    %163 = vmatprep.subr.mxu0 0.0
    %164 = vmatpush1.msra.mxu0 0.0
    %165 = vmatprep.subr.mxu0 0.0
    %166 = vmatpush1.msra.mxu0 0.0
    %167 = vmatprep.subr.mxu0 0.0
    %168 = vmatpush1.msra.mxu0 0.0
    %169 = vmatprep.subr.mxu0 0.0
    %170 = vmatpush1.msra.mxu0 0.0
    %171 = vmatprep.subr.mxu0 0.0
    %172 = vmatpush1.msra.mxu0 0.0
    %173 = vmatprep.subr.mxu0 0.0
    %174 = vmatpush1.msra.mxu0 0.0
    %175 = vmatprep.subr.mxu0 0.0
    %176 = vmatpush1.msra.mxu0 0.0
    %177 = vmatprep.subr.mxu0 0.0
    %178 = vmatpush1.msra.mxu0 0.0
    %179 = vmatprep.subr.mxu0 0.0
    %180 = vmatpush1.msra.mxu0 0.0
    %181 = vmatprep.subr.mxu0 0.0
    %182 = vmatpush1.msra.mxu0 0.0
    %183 = vmatprep.subr.mxu0 0.0
    %184 = vmatpush1.msra.mxu0 0.0
    %185 = vmatprep.subr.mxu0 0.0
    %186 = vmatpush1.msra.mxu0 0.0
    %187 = vmatprep.subr.mxu0 0.0
    %188 = vmatpush1.msra.mxu0 0.0
    %189 = vmatprep.subr.mxu0 0.0
    %190 = vmatpush1.msra.mxu0 0.0
    %191 = vmatprep.subr.mxu0 0.0
    %192 = vmatpush1.msra.mxu0 0.0
    %193 = vmatprep.subr.mxu0 0.0
    %194 = vmatpush1.msra.mxu0 0.0
    %195 = vmatprep.subr.mxu0 0.0
    %196 = vmatpush1.msra.mxu0 0.0
    %197 = vmatprep.subr.mxu0 0.0
    %198 = vmatpush1.msra.mxu0 0.0
    %199 = vmatprep.subr.mxu0 0.0
    %200 = vmatpush1.msra.mxu0 0.0
    %201 = vmatprep.subr.mxu0 0.0
    %202 = vmatpush1.msra.mxu0 0.0
    %203 = vmatprep.subr.mxu0 0.0
    %204 = vmatpush1.msra.mxu0 0.0
    %205 = vmatprep.subr.mxu0 0.0
    %206 = vmatpush1.msra.mxu0 0.0
    %207 = vmatprep.subr.mxu0 0.0
    %208 = vmatpush1.msra.mxu0 0.0
    %209 = vmatprep.subr.mxu0 0.0
    %210 = vmatpush1.msra.mxu0 0.0
    %211 = vmatprep.subr.mxu0 0.0
    %212 = vmatpush1.msra.mxu0 0.0
    %213 = vmatprep.subr.mxu0 0.0
    %214 = vmatpush1.msra.mxu0 0.0
    %215 = vmatprep.subr.mxu0 0.0
    %216 = vmatpush1.msra.mxu0 0.0
    %217 = vmatprep.mubr.f32.mxu0 0.0
    %218 = vmatmul.mubr.f32.gmra.mrb[0].mxu0 %v80
    %v219 = vpop.f32.mrb[0].mxu0
    %v220 = vadd.f32 %v76, %v219
    %v221 = vpop.f32.mrb[0].mxu0
    %v222 = vadd.f32 %v76, %v221
    %223 = vdwg.mxu0
    %v224 = vsub.f32 0.0, %v149
    %v225 = vsub.f32 0.0, %v151
    %v226 = vsub.f32 0.0, %v220
    %v227 = vsub.f32 0.0, %v222
    %v228 = vmul.f32 %v224, 1.442695
    %v229 = vpow.pop %v228
    %v230 = vmul.f32 %v225, 1.442695
    %v231 = vpow.pop %v230
    %v232 = vmul.f32 %v226, 1.442695
    %v233 = vpow.pop %v232
    %v234 = vmul.f32 %v227, 1.442695
    %v235 = vpow.pop %v234
    %v236 = vadd.f32 %v229, 1.0
    %v237 = vadd.f32 %v231, 1.0
    %v238 = vadd.f32 %v233, 1.0
    %v239 = vadd.f32 %v235, 1.0
    %v240 = vrcp.pop %v236
    %v241 = vmul.f32 1.0, %v240
    %v242 = vrcp.pop %v237
    %v243 = vmul.f32 1.0, %v242
    %v244 = vrcp.pop %v238
    %v245 = vmul.f32 1.0, %v244
    %v246 = vrcp.pop %v239
    %v247 = vmul.f32 1.0, %v246
    %v248 = vmul.f32 %v149, %v241
    %v249 = vmul.f32 %v151, %v243
    %v250 = vmul.f32 %v220, %v245
    %v251 = vmul.f32 %v222, %v247
    %v252 = vadd.f32 %v248, %v63
    %v253 = vadd.f32 %v249, %v64
    %v254 = vadd.f32 %v250, %v65
    %v255 = vadd.f32 %v251, %v66
    %256 = vst [vmem:[#allocation7] sm:$0xff] %v252
    %257 = vst [vmem:[#allocation7 + $0x8] sm:$0xff] %v253
    %258 = vst [vmem:[#allocation7 + $0x10] sm:$0xff] %v254
    %259 = vst [vmem:[#allocation7 + $0x18] sm:$0xff] %v255
    %v260 = vld [vmem:[%s3] sm:$0xff]
    %v261 = vld [vmem:[%s3 + $0x8] sm:$0xff]
    %v262 = vld [vmem:[%s3 + $0x10] sm:$0xff]
    %v263 = vld [vmem:[%s3 + $0x18] sm:$0xff]
    %v264 = vld [vmem:[#allocation5] sm:$0xff]
    %v265 = vld [vmem:[#allocation5 + $0x8] sm:$0xff]
    %v266 = vld [vmem:[%s5] sm:$0xff]
    %v267 = vld [vmem:[%s5 + $0x8] sm:$0xff]
    %269 = vset.pattern.permute.xlu0 0
    %270 = vperm.xlu0 %269, %v266
    %v271 = vpop.permute.xlu0 %270
    %274 = vset.pattern.permute.xlu0 0
    %275 = vperm.xlu0 %274, %v267
    %v276 = vpop.permute.xlu0 %275
    %vm278 = vcmask 261120
    %v280 = vsel %vm278, %v264, 0
    %v283 = vsel %vm278, %v265, 0
    %285 = vmatprep.subr.mxu0 0.0
    %286 = vmatpush1.msra.mxu0 %v260
    %287 = vmatprep.subr.mxu0 0.0
    %288 = vmatpush1.msra.mxu0 %v261
    %289 = vmatprep.subr.mxu0 0.0
    %290 = vmatpush1.msra.mxu0 %v262
    %291 = vmatprep.subr.mxu0 0.0
    %292 = vmatpush1.msra.mxu0 %v263
    %293 = vmatprep.subr.mxu0 0.0
    %294 = vmatpush1.msra.mxu0 0.0
    %295 = vmatprep.subr.mxu0 0.0
    %296 = vmatpush1.msra.mxu0 0.0
    %297 = vmatprep.subr.mxu0 0.0
    %298 = vmatpush1.msra.mxu0 0.0
    %299 = vmatprep.subr.mxu0 0.0
    %300 = vmatpush1.msra.mxu0 0.0
    %301 = vmatprep.subr.mxu0 0.0
    %302 = vmatpush1.msra.mxu0 0.0
    %303 = vmatprep.subr.mxu0 0.0
    %304 = vmatpush1.msra.mxu0 0.0
    %305 = vmatprep.subr.mxu0 0.0
    %306 = vmatpush1.msra.mxu0 0.0
    %307 = vmatprep.subr.mxu0 0.0
    %308 = vmatpush1.msra.mxu0 0.0
    %309 = vmatprep.subr.mxu0 0.0
    %310 = vmatpush1.msra.mxu0 0.0
    %311 = vmatprep.subr.mxu0 0.0
    %312 = vmatpush1.msra.mxu0 0.0
    %313 = vmatprep.subr.mxu0 0.0
    %314 = vmatpush1.msra.mxu0 0.0
    %315 = vmatprep.subr.mxu0 0.0
    %316 = vmatpush1.msra.mxu0 0.0
    %317 = vmatprep.subr.mxu0 0.0
    %318 = vmatpush1.msra.mxu0 0.0
    %319 = vmatprep.subr.mxu0 0.0
    %320 = vmatpush1.msra.mxu0 0.0
    %321 = vmatprep.subr.mxu0 0.0
    %322 = vmatpush1.msra.mxu0 0.0
    %323 = vmatprep.subr.mxu0 0.0
    %324 = vmatpush1.msra.mxu0 0.0
    %325 = vmatprep.subr.mxu0 0.0
    %326 = vmatpush1.msra.mxu0 0.0
    %327 = vmatprep.subr.mxu0 0.0
    %328 = vmatpush1.msra.mxu0 0.0
    %329 = vmatprep.subr.mxu0 0.0
    %330 = vmatpush1.msra.mxu0 0.0
    %331 = vmatprep.subr.mxu0 0.0
    %332 = vmatpush1.msra.mxu0 0.0
    %333 = vmatprep.subr.mxu0 0.0
    %334 = vmatpush1.msra.mxu0 0.0
    %335 = vmatprep.subr.mxu0 0.0
    %336 = vmatpush1.msra.mxu0 0.0
    %337 = vmatprep.subr.mxu0 0.0
    %338 = vmatpush1.msra.mxu0 0.0
    %339 = vmatprep.subr.mxu0 0.0
    %340 = vmatpush1.msra.mxu0 0.0
    %341 = vmatprep.subr.mxu0 0.0
    %342 = vmatpush1.msra.mxu0 0.0
    %343 = vmatprep.subr.mxu0 0.0
    %344 = vmatpush1.msra.mxu0 0.0
    %345 = vmatprep.subr.mxu0 0.0
    %346 = vmatpush1.msra.mxu0 0.0
    %347 = vmatprep.subr.mxu0 0.0
    %348 = vmatpush1.msra.mxu0 0.0
    %349 = vmatprep.mubr.f32.mxu0 0.0
    %350 = vmatmul.mubr.f32.gmra.mrb[0].mxu0 %v280
    %v351 = vpop.f32.mrb[0].mxu0
    %v352 = vadd.f32 %v271, %v351
    %v353 = vpop.f32.mrb[0].mxu0
    %354 = vmatprep.mubr.f32.mxu0 0.0
    %355 = vmatmul.mubr.f32.gmra.mrb[0].mxu0 %v283
    %v356 = vpop.f32.mrb[0].mxu0
    %v357 = vadd.f32 %v276, %v356
    %v358 = vpop.f32.mrb[0].mxu0
    %359 = vdwg.mxu0
    %v360 = vsub.f32 0.0, %v352
    %v361 = vsub.f32 0.0, %v357
    %v362 = vmul.f32 %v360, 1.442695
    %v363 = vpow.pop %v362
    %v364 = vmul.f32 %v361, 1.442695
    %v365 = vpow.pop %v364
    %v366 = vadd.f32 %v363, 1.0
    %v367 = vadd.f32 %v365, 1.0
    %v368 = vrcp.pop %v366
    %v369 = vmul.f32 1.0, %v368
    %v370 = vrcp.pop %v367
    %v371 = vmul.f32 1.0, %v370
    %v372 = vmul.f32 %v352, %v369
    %v373 = vmul.f32 %v357, %v371
    %v374 = vadd.f32 %v372, %v260
    %v375 = vadd.f32 %v373, %v261
    %376 = vst [vmem:[#allocation8] sm:$0xff] %v374
    %377 = vst [vmem:[#allocation8 + $0x8] sm:$0xff] %v375
    %v378 = vld [vmem:[%s6] sm:$0xff]
    %v379 = vld [vmem:[%s6 + $0x8] sm:$0xff]
    %v380 = vld [vmem:[%s6 + $0x10] sm:$0xff]
    %v381 = vld [vmem:[%s6 + $0x18] sm:$0xff]
    %v382 = vld [vmem:[%s6 + $0x20] sm:$0xff]
    %v383 = vld [vmem:[%s6 + $0x28] sm:$0xff]
    %v384 = vld [vmem:[%s6 + $0x30] sm:$0xff]
    %v385 = vld [vmem:[%s6 + $0x38] sm:$0xff]
    %v386 = vld [vmem:[%s7] sm:$0xff]
    %v387 = vld [vmem:[%s7 + $0x8] sm:$0xff]
    %v388 = vld [vmem:[%s7 + $0x10] sm:$0xff]
    %v389 = vld [vmem:[%s7 + $0x18] sm:$0xff]
    %v390 = vld [vmem:[%s8] sm:$0xff]
    %v391 = vld [vmem:[%s8 + $0x8] sm:$0xff]
    %v392 = vld [vmem:[%s8 + $0x10] sm:$0xff]
    %v393 = vld [vmem:[%s8 + $0x18] sm:$0xff]
    %395 = vset.pattern.permute.xlu0 0
    %396 = vperm.xlu0 %395, %v390
    %v397 = vpop.permute.xlu0 %396
    %400 = vset.pattern.permute.xlu0 0
    %401 = vperm.xlu0 %400, %v391
    %v402 = vpop.permute.xlu0 %401
    %405 = vset.pattern.permute.xlu0 0
    %406 = vperm.xlu0 %405, %v392
    %v407 = vpop.permute.xlu0 %406
    %410 = vset.pattern.permute.xlu0 0
    %411 = vperm.xlu0 %410, %v393
    %v412 = vpop.permute.xlu0 %411
    %vm414 = vcmask 523264
    %v416 = vsel %vm414, %v386, 0
    %v419 = vsel %vm414, %v387, 0
    %v422 = vsel %vm414, %v388, 0
    %v425 = vsel %vm414, %v389, 0
    %427 = vmatprep.subr.mxu0 0.0
    %428 = vmatpush1.msra.mxu0 %v378
    %429 = vmatprep.subr.mxu0 0.0
    %430 = vmatpush1.msra.mxu0 %v379
    %431 = vmatprep.subr.mxu0 0.0
    %432 = vmatpush1.msra.mxu0 %v380
    %433 = vmatprep.subr.mxu0 0.0
    %434 = vmatpush1.msra.mxu0 %v381
    %435 = vmatprep.subr.mxu0 0.0
    %436 = vmatpush1.msra.mxu0 %v382
    %437 = vmatprep.subr.mxu0 0.0
    %438 = vmatpush1.msra.mxu0 %v383
    %439 = vmatprep.subr.mxu0 0.0
    %440 = vmatpush1.msra.mxu0 %v384
    %441 = vmatprep.subr.mxu0 0.0
    %442 = vmatpush1.msra.mxu0 %v385
    %443 = vmatprep.subr.mxu0 0.0
    %444 = vmatpush1.msra.mxu0 0.0
    %445 = vmatprep.subr.mxu0 0.0
    %446 = vmatpush1.msra.mxu0 0.0
    %447 = vmatprep.subr.mxu0 0.0
    %448 = vmatpush1.msra.mxu0 0.0
    %449 = vmatprep.subr.mxu0 0.0
    %450 = vmatpush1.msra.mxu0 0.0
    %451 = vmatprep.subr.mxu0 0.0
    %452 = vmatpush1.msra.mxu0 0.0
    %453 = vmatprep.subr.mxu0 0.0
    %454 = vmatpush1.msra.mxu0 0.0
    %455 = vmatprep.subr.mxu0 0.0
    %456 = vmatpush1.msra.mxu0 0.0
    %457 = vmatprep.subr.mxu0 0.0
    %458 = vmatpush1.msra.mxu0 0.0
    %459 = vmatprep.subr.mxu0 0.0
    %460 = vmatpush1.msra.mxu0 0.0
    %461 = vmatprep.subr.mxu0 0.0
    %462 = vmatpush1.msra.mxu0 0.0
    %463 = vmatprep.subr.mxu0 0.0
    %464 = vmatpush1.msra.mxu0 0.0
    %465 = vmatprep.subr.mxu0 0.0
    %466 = vmatpush1.msra.mxu0 0.0
    %467 = vmatprep.subr.mxu0 0.0
    %468 = vmatpush1.msra.mxu0 0.0
    %469 = vmatprep.subr.mxu0 0.0
    %470 = vmatpush1.msra.mxu0 0.0
    %471 = vmatprep.subr.mxu0 0.0
    %472 = vmatpush1.msra.mxu0 0.0
    %473 = vmatprep.subr.mxu0 0.0
    %474 = vmatpush1.msra.mxu0 0.0
    %475 = vmatprep.subr.mxu0 0.0
    %476 = vmatpush1.msra.mxu0 0.0
    %477 = vmatprep.subr.mxu0 0.0
    %478 = vmatpush1.msra.mxu0 0.0
    %479 = vmatprep.subr.mxu0 0.0
    %480 = vmatpush1.msra.mxu0 0.0
    %481 = vmatprep.subr.mxu0 0.0
    %482 = vmatpush1.msra.mxu0 0.0
    %483 = vmatprep.subr.mxu0 0.0
    %484 = vmatpush1.msra.mxu0 0.0
    %485 = vmatprep.subr.mxu0 0.0
    %486 = vmatpush1.msra.mxu0 0.0
    %487 = vmatprep.subr.mxu0 0.0
    %488 = vmatpush1.msra.mxu0 0.0
    %489 = vmatprep.subr.mxu0 0.0
    %490 = vmatpush1.msra.mxu0 0.0
    %491 = vmatprep.mubr.f32.mxu0 0.0
    %492 = vmatmul.mubr.f32.gmra.mrb[0].mxu0 %v416
    %v493 = vpop.f32.mrb[0].mxu0
    %v494 = vadd.f32 %v397, %v493
    %v495 = vpop.f32.mrb[0].mxu0
    %496 = vmatprep.mubr.f32.mxu0 0.0
    %497 = vmatmul.mubr.f32.gmra.mrb[0].mxu0 %v419
    %v498 = vpop.f32.mrb[0].mxu0
    %v499 = vadd.f32 %v402, %v498
    %v500 = vpop.f32.mrb[0].mxu0
    %501 = vmatprep.mubr.f32.mxu0 0.0
    %502 = vmatmul.mubr.f32.gmra.mrb[0].mxu0 %v422
    %v503 = vpop.f32.mrb[0].mxu0
    %v504 = vadd.f32 %v407, %v503
    %v505 = vpop.f32.mrb[0].mxu0
    %506 = vmatprep.mubr.f32.mxu0 0.0
    %507 = vmatmul.mubr.f32.gmra.mrb[0].mxu0 %v425
    %v508 = vpop.f32.mrb[0].mxu0
    %v509 = vadd.f32 %v412, %v508
    %v510 = vpop.f32.mrb[0].mxu0
    %511 = vdwg.mxu0
    %v512 = vsub.f32 0.0, %v494
    %v513 = vsub.f32 0.0, %v499
    %v514 = vsub.f32 0.0, %v504
    %v515 = vsub.f32 0.0, %v509
    %v516 = vmul.f32 %v512, 1.442695
    %v517 = vpow.pop %v516
    %v518 = vmul.f32 %v513, 1.442695
    %v519 = vpow.pop %v518
    %v520 = vmul.f32 %v514, 1.442695
    %v521 = vpow.pop %v520
    %v522 = vmul.f32 %v515, 1.442695
    %v523 = vpow.pop %v522
    %v524 = vadd.f32 %v517, 1.0
    %v525 = vadd.f32 %v519, 1.0
    %v526 = vadd.f32 %v521, 1.0
    %v527 = vadd.f32 %v523, 1.0
    %v528 = vrcp.pop %v524
    %v529 = vmul.f32 1.0, %v528
    %v530 = vrcp.pop %v525
    %v531 = vmul.f32 1.0, %v530
    %v532 = vrcp.pop %v526
    %v533 = vmul.f32 1.0, %v532
    %v534 = vrcp.pop %v527
    %v535 = vmul.f32 1.0, %v534
    %v536 = vmul.f32 %v494, %v529
    %v537 = vmul.f32 %v499, %v531
    %v538 = vmul.f32 %v504, %v533
    %v539 = vmul.f32 %v509, %v535
    %v540 = vadd.f32 %v536, %v378
    %v541 = vadd.f32 %v537, %v379
    %v542 = vadd.f32 %v538, %v380
    %v543 = vadd.f32 %v539, %v381
    %544 = vst.msk [vmem:[#allocation10] sm:$0xff] %vm278, %v540
    %545 = vst.msk [vmem:[#allocation10 + $0x8] sm:$0xff] %vm278, %v541
    %546 = vst.msk [vmem:[#allocation10 + $0x10] sm:$0xff] %vm278, %v542
    %547 = vst.msk [vmem:[#allocation10 + $0x18] sm:$0xff] %vm278, %v543
    // Predicated region
    $region46: #{tpu_custom_call.1} parent=1 // pred_check
      _
    $region47: #{tpu_custom_call.1} parent=1 // pred_check_branch
      %549 = sbr.rel (0) target = $region49
    $region48: #{tpu_custom_call.1} parent=1 // pred_region
      %s551 = ssub.s32 512, 512
      %552 = vsyncadd [#allocation4], %s551
      %s554 = sshll.u32 [#allocation7], 4
      %s555 = int_to_ptr.vmem [resolvable:$true] %s554
      %557 = dma.vmem_to_hbm [thread:$0]  %s555, 512, %s9, [#allocation4]
    $region49: #{tpu_custom_call.1} parent=1 // pred_fallthru
      _
    // Predicated region
    $region50: #{tpu_custom_call.1} parent=1 // pred_check
      _
    $region51: #{tpu_custom_call.1} parent=1 // pred_check_branch
      %559 = sbr.rel (0) target = $region53
    $region52: #{tpu_custom_call.1} parent=1 // pred_region
      %s561 = ssub.s32 256, 256
      %562 = vsyncadd [#allocation9], %s561
      %s563 = sshll.u32 [#allocation8], 4
      %s564 = int_to_ptr.vmem [resolvable:$true] %s563
      %569 = dma.vmem_to_hbm [thread:$0]  %s564, 256, %s10, [#allocation9], 128, 128, 8
    $region53: #{tpu_custom_call.1} parent=1 // pred_fallthru
      _
    // Predicated region
    $region54: #{tpu_custom_call.1} parent=1 // pred_check
      _
    $region55: #{tpu_custom_call.1} parent=1 // pred_check_branch
      %571 = sbr.rel (0) target = $region57
    $region56: #{tpu_custom_call.1} parent=1 // pred_region
      %s573 = ssub.s32 512, 512
      %574 = vsyncadd [#allocation9], %s573
      %s575 = sshll.u32 [#allocation10], 4
      %s576 = int_to_ptr.vmem [resolvable:$true] %s575
      %581 = dma.vmem_to_hbm [thread:$0]  %s576, 512, %s11, [#allocation9], 128, 128, 8
    $region57: #{tpu_custom_call.1} parent=1 // pred_fallthru
      _
    // Predicated region
    $region58: #{tpu_custom_call.1} parent=1 // pred_check
      _
    $region59: #{tpu_custom_call.1} parent=1 // pred_check_branch
      %583 = sbr.rel (0) target = $region61
    $region60: #{tpu_custom_call.1} parent=1 // pred_region
      %584 = dma.done [#allocation4], 512
    $region61: #{tpu_custom_call.1} parent=1 // pred_fallthru
      _
    // Predicated region
    $region62: #{tpu_custom_call.1} parent=1 // pred_check
      _
    $region63: #{tpu_custom_call.1} parent=1 // pred_check_branch
      %586 = sbr.rel (0) target = $region65
    $region64: #{tpu_custom_call.1} parent=1 // pred_region
      %587 = dma.done [#allocation9], 256
    $region65: #{tpu_custom_call.1} parent=1 // pred_fallthru
      _
    // Predicated region
    $region66: #{tpu_custom_call.1} parent=1 // pred_check
      _
    $region67: #{tpu_custom_call.1} parent=1 // pred_check_branch
      %589 = sbr.rel (0) target = $region69
    $region68: #{tpu_custom_call.1} parent=1 // pred_region
      %590 = dma.done [#allocation9], 512
    $region69: #{tpu_custom_call.1} parent=1 // pred_fallthru
      _
    %591 = vsyncpa [#allocation3], 1
    %592 = vsyncpa [#allocation6], 1
    %593 = vsyncpa [#allocation4], 1
    %594 = vsyncpa [#allocation9], 1

</llo_original>
